<compile_context>
chip_gen: v6e
topology: v6e:2x2x1
jax: 0.10.0
libtpu: 0.0.40
codegen_flags: <defaults>
</compile_context>

<pallas_src>
import jax
import jax.numpy as jnp
from jax.experimental import pallas as pl
from jax.experimental.pallas import tpu as pltpu


_LANE = 128
_TARGET_BLOCK_BYTES = 8 * 1024 * 1024   # ~8 MiB per block (v6e/v7x sweet spot)
_VMEM_LIMIT_BYTES = 40 * 1024 * 1024    # in+out, double-buffered: 4 x 8 MiB = 32 MiB
_MIN_GRID_STEPS = 8                     # >= 4 pipelined steps per v7x TensorCore


def flatten(x):
    """True equivalent of torch Flatten on a contiguous tensor: metadata-only."""
    n = x.shape[0]
    d = 1
    for s in x.shape[1:]:
        d *= s
    return x.reshape(n, d)


def _copy_kernel(x_ref, o_ref):
    # Straight tile copy (identity); all the real work is the DMA pipeline.
    o_ref[...] = x_ref[...]


def _sublane_multiple(dtype):
    # Full-vreg sublane count: 8 for 32-bit, 16 for 16-bit, 32 for 8-bit dtypes.
    bits = jnp.dtype(dtype).itemsize * 8
    return max(8, 256 // bits)


def _pick_row_tile(rows, itemsize, sub):
    """Rows per block for a (rows, 128) lane-dense slab."""
    target_rows = max(1, _TARGET_BLOCK_BYTES // (_LANE * itemsize))
    if rows <= sub:
        return rows                      # tiny input: full extent (legal block)
    tile = min(target_rows, rows)
    tile = max(sub, (tile // sub) * sub)  # keep sublane-aligned
    # Ensure enough grid steps for double-buffered pipelining on both v7x TCs.
    if pl.cdiv(rows, tile) < _MIN_GRID_STEPS and rows >= _MIN_GRID_STEPS * sub:
        tile = ((pl.cdiv(rows, _MIN_GRID_STEPS) + sub - 1) // sub) * sub
    return tile


def _pallas_copy_slab(slab):
    """Copy a lane-dense (rows, 128) slab through a 1-D pipelined grid."""
    rows, lane = slab.shape
    itemsize = jnp.dtype(slab.dtype).itemsize
    row_tile = _pick_row_tile(rows, itemsize, _sublane_multiple(slab.dtype))
    grid = (pl.cdiv(rows, row_tile),)
    total_bytes = rows * lane * itemsize
    return pl.pallas_call(
        _copy_kernel,
        out_shape=jax.ShapeDtypeStruct((rows, lane), slab.dtype),
        grid_spec=pltpu.PrefetchScalarGridSpec(
            num_scalar_prefetch=0,
            grid=grid,
            in_specs=[pl.BlockSpec((row_tile, lane), lambda i: (i, 0))],
            out_specs=pl.BlockSpec((row_tile, lane), lambda i: (i, 0)),
        ),
        compiler_params=pltpu.CompilerParams(
            dimension_semantics=("parallel",),
            vmem_limit_bytes=_VMEM_LIMIT_BYTES,
        ),
        cost_estimate=pl.CostEstimate(
            flops=0, transcendentals=0, bytes_accessed=2 * total_bytes),
    )(slab)


def flatten_pallas(x):
    """Pallas-materialized Flatten: (N, *rest) -> (N, prod(rest))."""
    n = x.shape[0]
    d = 1
    for s in x.shape[1:]:
        d *= s
    total = n * d

    # Row-major reshape (matches torch .view on contiguous NCHW) — free metadata op.
    flat = x.reshape(total)

    prefix_len = (total // _LANE) * _LANE
    if prefix_len == 0:
        # Fewer than 128 elements: nothing worth a kernel; metadata-only.
        return flat.reshape(n, d)

    # Fast path: lane-dense, sublane-full slab over the contiguous element
    # stream. Every block is one contiguous HBM chunk; no masked edges.
    slab = flat[:prefix_len].reshape(prefix_len // _LANE, _LANE)
    prefix_out = _pallas_copy_slab(slab).reshape(prefix_len)

    if prefix_len == total:
        return prefix_out.reshape(n, d)

    # Non-multiple-of-128 total: handle the <128-element tail in plain JAX
    # (kept contiguous / lane-dense; no strided or masked kernel blocks).
    tail = flat[prefix_len:]
    return jnp.concatenate([prefix_out, tail]).reshape(n, d)


if __name__ == "__main__":
    key = jax.random.PRNGKey(0)

    # Small NCHW input consistent with the module's typical conv-feature input.
    x = jax.random.normal(key, (2, 4, 16, 16), dtype=jnp.float32)
    out = jax.block_until_ready(flatten_pallas(x))
    ref = x.reshape(x.shape[0], -1)
    assert out.shape == (2, 4 * 16 * 16), out.shape
    assert jnp.array_equal(out, ref), "Pallas flatten mismatch (slab path)"

    # Exercise the non-multiple-of-128 fallback (prefix slab + JAX tail).
    y = jax.random.normal(jax.random.PRNGKey(1), (2, 3, 5, 5), dtype=jnp.float32)
    out_y = jax.block_until_ready(flatten_pallas(y))
    ref_y = y.reshape(y.shape[0], -1)
    assert out_y.shape == (2, 75), out_y.shape
    assert jnp.array_equal(out_y, ref_y), "Pallas flatten mismatch (fallback path)"

    print("KERNEL_OK")
</pallas_src>

<mosaic_0001>
module attributes {stable_mosaic.version = 11 : i64} {
  func.func @_copy_kernel(%arg0: i32, %arg1: memref<16x128xf32, #tpu.memory_space<vmem>>, %arg2: memref<16x128xf32, #tpu.memory_space<vmem>>) attributes {dimension_semantics = [#tpu.dimension_semantics<parallel>], iteration_bounds = array<i64: 1>, scalar_prefetch = 0 : i64, scratch_operands = 0 : i64, tpu.core_type = #tpu.core_type<tc>, window_params = [{transform_indices = @transform_0, window_bounds = array<i64: 16, 128>}, {transform_indices = @transform_1, window_bounds = array<i64: 16, 128>}]} {
    %c0 = arith.constant 0 : index
    %c0_0 = arith.constant 0 : index
    %0 = vector.load %arg1[%c0, %c0_0] : memref<16x128xf32, #tpu.memory_space<vmem>>, vector<16x128xf32>
    %c0_1 = arith.constant 0 : index
    %c0_2 = arith.constant 0 : index
    %1 = vector.load %arg2[%c0_1, %c0_2] : memref<16x128xf32, #tpu.memory_space<vmem>>, vector<16x128xf32>
    tpu.vector_store %arg2[%c0_1, %c0_2], %0 {strides = array<i32>} : memref<16x128xf32, #tpu.memory_space<vmem>>, vector<16x128xf32>,
    return
  }
  func.func @transform_0(%arg0: i32) -> (i32, i32) {
    %c0_i32 = arith.constant 0 : i32
    %c0_i32_0 = arith.constant 0 : i32
    return %arg0, %c0_i32 : i32, i32
  }
  func.func @transform_1(%arg0: i32) -> (i32, i32) {
    %c0_i32 = arith.constant 0 : i32
    %c0_i32_0 = arith.constant 0 : i32
    return %arg0, %c0_i32 : i32, i32
  }
}

</mosaic_0001>

<llo_original>
// kernel: tpu_custom_call.1
$region0: #{tpu_custom_call.1}
  #allocation0 [shape = 'u32[]', space=smem, size = 0x4, offset = 0x4, fixed_abs, tag = 'smem constant byte address 0x4 - core index']
  #allocation1 [shape = 'u32[144,128]{1,0:T(1,128)}', space=vmem, size = 0x12000, scoped, tag = 'internal scratch']
  %s0 = inlined_call_operand.hbm [shape: f32[16,128], index: 0, kind: input, shape index: {}]
  %s1 = inlined_call_operand.hbm [shape: f32[16,128], index: 1, kind: output, shape index: {}]
  %s2 = sld [smem:[#allocation0]]
  $region18: #{tpu_custom_call.1} parent=0
    _
  %s4 = ssub.s32 1, %s2
  %s5 = scalar_select 0, %s4, %s2
  $region1: #{tpu_custom_call.1} parent=0
    #allocation2 [shape = 'u8[8192]{0}', space=vmem, size = 0x2000, scoped, tag = 'input window, operand 0, single buffered']
    #allocation3 [shape = 's32[1]{0}', space=sflag, size = 0x4, scoped, tag = 'scoped memory for tpu_custom_call.1']
    #allocation4 [shape = 's32[1]{0}', space=sflag, size = 0x4, scoped, tag = 'scoped memory for tpu_custom_call.1']
    #allocation5 [shape = 'u8[8192]{0}', space=vmem, size = 0x2000, scoped, tag = 'output window, operand 0, single buffered']
    %6 = vsyncpa [#allocation3], 0
    %7 = vsyncpa [#allocation4], 0
    // Predicated region
    $region2: #{tpu_custom_call.1} parent=1 // pred_check
      _
    $region3: #{tpu_custom_call.1} parent=1 // pred_check_branch
      %9 = sbr.rel (0) target = $region5
    $region4: #{tpu_custom_call.1} parent=1 // pred_region
      %s11 = ssub.s32 256, 256
      %12 = vsyncadd [#allocation3], %s11
      %s13 = sshll.u32 [#allocation2], 4
      %s14 = int_to_ptr.vmem [resolvable:$true] %s13
      %19 = dma.hbm_to_vmem [thread:$0]  %s0, 256, %s14, [#allocation3], 128, 128, 8
    $region5: #{tpu_custom_call.1} parent=1 // pred_fallthru
      _
    // Predicated region
    $region6: #{tpu_custom_call.1} parent=1 // pred_check
      _
    $region7: #{tpu_custom_call.1} parent=1 // pred_check_branch
      %21 = sbr.rel (0) target = $region9
    $region8: #{tpu_custom_call.1} parent=1 // pred_region
      %22 = dma.done [#allocation3], 256
    $region9: #{tpu_custom_call.1} parent=1 // pred_fallthru
      _
    %v23 = vld [vmem:[#allocation2] sm:$0xff]
    %v24 = vld [vmem:[#allocation2 + $0x8] sm:$0xff]
    %25 = vst [vmem:[#allocation5] sm:$0xff] %v23
    %26 = vst [vmem:[#allocation5 + $0x8] sm:$0xff] %v24
    // Predicated region
    $region10: #{tpu_custom_call.1} parent=1 // pred_check
      _
    $region11: #{tpu_custom_call.1} parent=1 // pred_check_branch
      %28 = sbr.rel (0) target = $region13
    $region12: #{tpu_custom_call.1} parent=1 // pred_region
      %s30 = ssub.s32 256, 256
      %31 = vsyncadd [#allocation4], %s30
      %s32 = sshll.u32 [#allocation5], 4
      %s33 = int_to_ptr.vmem [resolvable:$true] %s32
      %38 = dma.vmem_to_hbm [thread:$0]  %s33, 256, %s1, [#allocation4], 128, 128, 8
    $region13: #{tpu_custom_call.1} parent=1 // pred_fallthru
      _
    // Predicated region
    $region14: #{tpu_custom_call.1} parent=1 // pred_check
      _
    $region15: #{tpu_custom_call.1} parent=1 // pred_check_branch
      %40 = sbr.rel (0) target = $region17
    $region16: #{tpu_custom_call.1} parent=1 // pred_region
      %41 = dma.done [#allocation4], 256
    $region17: #{tpu_custom_call.1} parent=1 // pred_fallthru
      _
    %42 = vsyncpa [#allocation3], 1
    %43 = vsyncpa [#allocation4], 1

</llo_original>
